<compile_context>
chip_gen: v7x
topology: tpu7x:2x2x1
jax: 0.10.0
libtpu: 0.0.40
codegen_flags: <defaults>
</compile_context>

<pallas_src>
import math

import jax
import jax.numpy as jnp
from jax.experimental import pallas as pl
from jax.experimental.pallas import tpu as pltpu


# ---------------------------------------------------------------------------
# Kernel
# ---------------------------------------------------------------------------
def _pe_add_kernel(x_ref, pe_ref, o_ref):
    # x_ref/o_ref: (rows_tile, w_tile) tile of the flattened input/output.
    # pe_ref:      (1, w_tile) PE chunk, broadcast over the sublane (row) axis.
    o_ref[...] = x_ref[...] + pe_ref[...]


# ---------------------------------------------------------------------------
# Setup-time PE table (PyTorch-equivalent buffer init)
# ---------------------------------------------------------------------------
def make_positional_encoding(d_model: int, max_len: int = 100,
                             dtype=jnp.float32) -> jnp.ndarray:
    """Builds the (1, max_len, d_model) sinusoidal table.

    Computed in float32, cast once to `dtype` here (setup time) so the forward
    pass never pays a per-call astype over the table.
    """
    position = jnp.arange(0, max_len, dtype=jnp.float32)[:, None]            # (max_len, 1)
    div_term = jnp.exp(
        jnp.arange(0, d_model, 2, dtype=jnp.float32) * (-math.log(10000.0) / d_model)
    )
    pe = jnp.zeros((max_len, d_model), dtype=jnp.float32)
    pe = pe.at[:, 0::2].set(jnp.sin(position * div_term))
    # cos columns: floor(D/2) of them -> slice div_term so odd d_model also works.
    pe = pe.at[:, 1::2].set(jnp.cos(position * div_term[: d_model // 2]))
    return pe[None, :, :].astype(dtype)                                       # (1, max_len, D)


# ---------------------------------------------------------------------------
# Hardware queries (defensive: fall back to conservative defaults)
# ---------------------------------------------------------------------------
def _tpu_info():
    try:
        return pltpu.get_tpu_info()
    except Exception:
        return None


def _vmem_capacity_bytes() -> int:
    info = _tpu_info()
    if info is not None:
        try:
            cap = getattr(info, "vmem_capacity_bytes", None)
            if cap:
                return int(cap)
        except Exception:
            pass
    return 64 << 20  # conservative: v7x per-TensorCore VMEM


def _num_tensorcores() -> int:
    info = _tpu_info()
    if info is not None:
        for name in ("num_cores", "cores_per_chip", "num_tensorcores",
                     "tensorcores_per_chip", "tensor_cores_per_chip"):
            try:
                v = getattr(info, name, None)
                if isinstance(v, int) and v > 0:
                    return v
            except Exception:
                pass
    return 1  # if unknown, behave like a single-TC part (no forced split)


def _sublane_multiple(dtype) -> int:
    # Packed sublane tile: 8 rows for 32-bit, 16 for bf16/fp16, 32 for int8/fp8.
    itemsize = jnp.dtype(dtype).itemsize
    return max(8, 32 // max(1, itemsize))


# ---------------------------------------------------------------------------
# Tile-size policy
# ---------------------------------------------------------------------------
def _choose_tiles(B: int, W: int, itemsize: int, target_block_bytes: int,
                  sublane_mult: int, num_cores: int):
    """Pick (rows_tile, w_tile) for the flattened (B, W) add.

    rows_tile is a multiple of the dtype's packed sublane tile (or == B),
    w_tile is a multiple of 128 lanes (or == W), and a single in/out block
    stays within `target_block_bytes`.
    """
    row_bytes = max(1, W * itemsize)
    min_rows = min(B, sublane_mult)

    # --- W (lane) axis: only tile it when a minimal row tile exceeds the budget.
    if min_rows * row_bytes > target_block_bytes:
        w_elems = max(128, (target_block_bytes // (min_rows * itemsize)) // 128 * 128)
        w_tile = min(w_elems, -(-W // 128) * 128)
        return min_rows, w_tile

    # --- Row (batch) axis, full rows.
    if B * row_bytes <= target_block_bytes:
        if num_cores < 2 or B < 2 * sublane_mult:
            return B, W                       # one block; no forced split on 1-TC parts
        rows_tile = B                         # may shrink below for multi-TC balance
    else:
        rows_tile = max(sublane_mult,
                        (target_block_bytes // row_bytes) // sublane_mult * sublane_mult)
        rows_tile = min(rows_tile, B)

    if num_cores >= 2 and B >= 2 * sublane_mult:
        # Prefer equal-sized blocks with a step count that is a multiple of the
        # TensorCore count so both cores do the same amount of work.
        start = min(rows_tile, max(1, B // num_cores))
        start = max(sublane_mult, start // sublane_mult * sublane_mult)
        for cand in range(start, sublane_mult - 1, -sublane_mult):
            if B % cand == 0 and (B // cand) % num_cores == 0:
                return cand, W
        rows_tile = min(rows_tile, start)     # no perfectly even split; best effort
    return rows_tile, W


# ---------------------------------------------------------------------------
# Forward
# ---------------------------------------------------------------------------
def positional_encoding_forward(x: jnp.ndarray, pe: jnp.ndarray, *,
                                min_pallas_elems: int = 0,
                                donate_x: bool = False) -> jnp.ndarray:
    """x: (B, S, D); pe: (1, max_len, D) with S <= max_len. Returns x + pe[:, :S].

    For in-model use with small tensors, set min_pallas_elems ~ 1_000_000 so the
    add falls back to XLA and fuses with the producer op. If S is static and the
    table was built with max_len == S, the per-call slice/reshape of pe is free.
    """
    B, S, D = x.shape
    max_len = pe.shape[1]
    if S > max_len:
        raise ValueError(f"seq_len {S} exceeds positional table max_len {max_len}")

    pe_slice = pe[:, :S, :]
    if pe_slice.dtype != x.dtype:
        # Prefer building the table in x.dtype at setup; this is a fallback.
        pe_slice = pe_slice.astype(x.dtype)

    if B * S * D < min_pallas_elems:
        # Tiny problem: a fused XLA add beats pallas_call launch overhead.
        return x + pe_slice

    # Lane-dense flatten: last dim becomes S*D (wide rows -> unmasked vst).
    W = S * D
    x2 = x.reshape(B, W)
    pe2 = pe_slice.reshape(1, W)

    itemsize = jnp.dtype(x.dtype).itemsize
    sublane_mult = _sublane_multiple(x.dtype)
    num_cores = _num_tensorcores()
    vmem_cap = _vmem_capacity_bytes()

    # ~4 MiB blocks on v7x (64 MiB VMEM), ~8 MiB on v5e/v6e (128 MiB VMEM).
    target_block_bytes = min(8 << 20, max(1 << 20, vmem_cap // 16))
    rows_tile, w_tile = _choose_tiles(B, W, itemsize, target_block_bytes,
                                      sublane_mult, num_cores)

    grid = (pl.cdiv(B, rows_tile), pl.cdiv(W, w_tile))

    block_bytes = rows_tile * w_tile * itemsize
    pe_block_bytes = w_tile * itemsize
    # Double-buffered x + out blocks, double-buffered PE block, plus margin.
    vmem_need = 4 * block_bytes + 2 * pe_block_bytes + (4 << 20)
    vmem_limit = int(min(max(vmem_need, 16 << 20), vmem_cap))

    out2 = pl.pallas_call(
        _pe_add_kernel,
        out_shape=jax.ShapeDtypeStruct((B, W), x.dtype),
        grid=grid,
        in_specs=[
            pl.BlockSpec((rows_tile, w_tile), lambda i, j: (i, j)),  # x tile
            pl.BlockSpec((1, w_tile), lambda i, j: (0, j)),          # PE chunk (resident when 1 W-chunk)
        ],
        out_specs=pl.BlockSpec((rows_tile, w_tile), lambda i, j: (i, j)),
        compiler_params=pltpu.CompilerParams(
            dimension_semantics=("parallel", "parallel"),
            vmem_limit_bytes=vmem_limit,
        ),
        input_output_aliases=({0: 0} if donate_x else {}),
    )(x2, pe2)

    return out2.reshape(B, S, D)


if __name__ == "__main__":
    # Small shapes consistent with the module: batch=2, seq=8, d_model=32, max_len=22
    B, S, D = 2, 8, 32
    MAX_LEN = 22

    key = jax.random.PRNGKey(0)
    x = jax.random.normal(key, (B, S, D), dtype=jnp.float32)

    pe = make_positional_encoding(D, max_len=MAX_LEN, dtype=x.dtype)  # deterministic buffer

    out = positional_encoding_forward(x, pe)
    out = jax.block_until_ready(out)

    # Pure-JAX reference check of the forward semantics: x + pe[:, :S]
    pe_f32 = make_positional_encoding(D, max_len=MAX_LEN, dtype=jnp.float32)
    ref = x + pe_f32[:, :S, :]
    assert out.shape == (B, S, D)
    assert jnp.allclose(out, ref, atol=1e-6, rtol=1e-6), "mismatch vs reference"

    print("KERNEL_OK")
</pallas_src>

<mosaic_0001>
module attributes {stable_mosaic.version = 11 : i64} {
  func.func @_pe_add_kernel(%arg0: i32, %arg1: i32, %arg2: memref<2x256xf32, #tpu.memory_space<vmem>>, %arg3: memref<1x256xf32, #tpu.memory_space<vmem>>, %arg4: memref<2x256xf32, #tpu.memory_space<vmem>>) attributes {dimension_semantics = [#tpu.dimension_semantics<parallel>, #tpu.dimension_semantics<parallel>], iteration_bounds = array<i64: 1, 1>, scalar_prefetch = 0 : i64, scratch_operands = 0 : i64, tpu.core_type = #tpu.core_type<tc>, window_params = [{transform_indices = @transform_0, window_bounds = array<i64: 2, 256>}, {transform_indices = @transform_1, window_bounds = array<i64: 1, 256>}, {transform_indices = @transform_2, window_bounds = array<i64: 2, 256>}]} {
    %c0 = arith.constant 0 : index
    %c0_0 = arith.constant 0 : index
    %0 = vector.load %arg2[%c0, %c0_0] : memref<2x256xf32, #tpu.memory_space<vmem>>, vector<2x256xf32>
    %c0_1 = arith.constant 0 : index
    %c0_2 = arith.constant 0 : index
    %1 = vector.load %arg3[%c0_1, %c0_2] : memref<1x256xf32, #tpu.memory_space<vmem>>, vector<1x256xf32>
    %2 = vector.broadcast %1 : vector<1x256xf32> to vector<2x256xf32>
    %3 = arith.addf %0, %2 : vector<2x256xf32>
    %c0_3 = arith.constant 0 : index
    %c0_4 = arith.constant 0 : index
    %4 = vector.load %arg4[%c0_3, %c0_4] : memref<2x256xf32, #tpu.memory_space<vmem>>, vector<2x256xf32>
    tpu.vector_store %arg4[%c0_3, %c0_4], %3 {strides = array<i32>} : memref<2x256xf32, #tpu.memory_space<vmem>>, vector<2x256xf32>,
    return
  }
  func.func @transform_0(%arg0: i32, %arg1: i32) -> (i32, i32) {
    %c0_i32 = arith.constant 0 : i32
    return %arg0, %arg1 : i32, i32
  }
  func.func @transform_1(%arg0: i32, %arg1: i32) -> (i32, i32) {
    %c0_i32 = arith.constant 0 : i32
    %c0_i32_0 = arith.constant 0 : i32
    return %c0_i32, %arg1 : i32, i32
  }
  func.func @transform_2(%arg0: i32, %arg1: i32) -> (i32, i32) {
    %c0_i32 = arith.constant 0 : i32
    return %arg0, %arg1 : i32, i32
  }
}

</mosaic_0001>

<llo_original>
// kernel: tpu_custom_call.1
$region0: #{tpu_custom_call.1}
  #allocation0 [shape = 'u32[]', space=smem, size = 0x4, offset = 0x4, fixed_abs, tag = 'smem constant byte address 0x4 - core index']
  #allocation1 [shape = 'u32[144,128]{1,0:T(1,128)}', space=vmem, size = 0x12000, scoped, tag = 'internal scratch']
  %s0 = inlined_call_operand.hbm [shape: f32[2,256], index: 0, kind: input, shape index: {}]
  %s1 = inlined_call_operand.vmem [shape: f32[1,256], index: 1, kind: input, shape index: {}]
  %s2 = inlined_call_operand.hbm [shape: f32[2,256], index: 2, kind: output, shape index: {}]
  %s3 = sld [smem:[#allocation0]]
  $region22: #{tpu_custom_call.1} parent=0
    _
  %s5 = ssub.s32 1, %s3
  %s6 = scalar_select 0, %s5, %s3
  $region1: #{tpu_custom_call.1} parent=0
    #allocation2 [shape = 'u8[2048]{0}', space=vmem, size = 0x800, scoped, tag = 'input window, operand 0, single buffered']
    #allocation3 [shape = 's32[1]{0}', space=sflag, size = 0x4, scoped, tag = 'scoped memory for tpu_custom_call.1']
    #allocation4 [shape = 's32[1]{0}', space=sflag, size = 0x4, scoped, tag = 'scoped memory for tpu_custom_call.1']
    #allocation5 [shape = 'u8[2048]{0}', space=vmem, size = 0x800, scoped, tag = 'output window, operand 0, single buffered']
    %7 = vsyncpa [#allocation3], 0
    %8 = vsyncpa [#allocation4], 0
    // Predicated region
    $region2: #{tpu_custom_call.1} parent=1 // pred_check
      _
    $region3: #{tpu_custom_call.1} parent=1 // pred_check_branch
      %10 = sbr.rel (0) target = $region5
    $region4: #{tpu_custom_call.1} parent=1 // pred_region
      %s12 = ssub.s32 64, 64
      %13 = vsyncadd [#allocation3], %s12
      %s15 = sshll.u32 [#allocation2], 4
      %s16 = int_to_ptr.vmem [resolvable:$true] %s15
      %18 = dma.hbm_to_vmem [thread:$0]  %s0, 64, %s16, [#allocation3]
    $region5: #{tpu_custom_call.1} parent=1 // pred_fallthru
      _
    // Predicated region
    $region6: #{tpu_custom_call.1} parent=1 // pred_check
      _
    $region7: #{tpu_custom_call.1} parent=1 // pred_check_branch
      %20 = sbr.rel (0) target = $region9
    $region8: #{tpu_custom_call.1} parent=1 // pred_region
      _
    $region9: #{tpu_custom_call.1} parent=1 // pred_fallthru
      _
    // Predicated region
    $region10: #{tpu_custom_call.1} parent=1 // pred_check
      _
    $region11: #{tpu_custom_call.1} parent=1 // pred_check_branch
      %22 = sbr.rel (0) target = $region13
    $region12: #{tpu_custom_call.1} parent=1 // pred_region
      %23 = dma.done [#allocation3], 64
    $region13: #{tpu_custom_call.1} parent=1 // pred_fallthru
      _
    %v24 = vld [vmem:[#allocation2] sm:$0xf]
    %v25 = vld [vmem:[%s1] sm:$0x3]
    %v27 = vlaneseq
    %v28 = vshrl.u32 %v27, 7
    %v29 = vsub.s32 0, %v28
    %v30 = vrot.slane %v25, %v29
    %v31 = vlaneseq
    %v32 = vshrl.u32 %v31, 7
    %v33 = vsub.s32 1, %v32
    %v34 = vrot.slane %v25, %v33
    %v35 = vcombine.low %v30, %v34
    %v37 = vunpack.c.l.s4 1983009808
    %v38 = vunpack.c.0.s8 %v37
    %v39 = vlaneseq
    %v40 = vshrl.u32 %v39, 7
    %v41 = vsub.s32 %v38, %v40
    %v42 = vrot.slane %v35, %v41
    %v44 = vadd.f32 %v24, %v42
    %45 = vst [vmem:[#allocation5] sm:$0xf] %v44
    // Predicated region
    $region14: #{tpu_custom_call.1} parent=1 // pred_check
      _
    $region15: #{tpu_custom_call.1} parent=1 // pred_check_branch
      %47 = sbr.rel (0) target = $region17
    $region16: #{tpu_custom_call.1} parent=1 // pred_region
      %s49 = ssub.s32 64, 64
      %50 = vsyncadd [#allocation4], %s49
      %s52 = sshll.u32 [#allocation5], 4
      %s53 = int_to_ptr.vmem [resolvable:$true] %s52
      %55 = dma.vmem_to_hbm [thread:$0]  %s53, 64, %s2, [#allocation4]
    $region17: #{tpu_custom_call.1} parent=1 // pred_fallthru
      _
    // Predicated region
    $region18: #{tpu_custom_call.1} parent=1 // pred_check
      _
    $region19: #{tpu_custom_call.1} parent=1 // pred_check_branch
      %57 = sbr.rel (0) target = $region21
    $region20: #{tpu_custom_call.1} parent=1 // pred_region
      %58 = dma.done [#allocation4], 64
    $region21: #{tpu_custom_call.1} parent=1 // pred_fallthru
      _
    %59 = vsyncpa [#allocation3], 1
    %60 = vsyncpa [#allocation4], 1

</llo_original>
